<compile_context>
chip_gen: v7x
topology: tpu7x:2x2x1
jax: 0.10.0
libtpu: 0.0.40
codegen_flags: <defaults>
</compile_context>

<pallas_src>
import functools

import jax
import jax.numpy as jnp
from jax.experimental import pallas as pl
from jax.experimental.pallas import tpu as pltpu


def _round_up(a: int, b: int) -> int:
    return ((a + b - 1) // b) * b


def _fit_tile(dim: int, target: int, granule: int) -> int:
    """Balanced tile for `dim`.

    dim <= target -> one full-extent block (allowed even if not a multiple of
    (8, 128); avoids any host-side padding).
    dim  > target -> split into ceil(dim/target) blocks, each rounded up to
    the layout granule, so padding waste is < one granule per dim.
    """
    if dim <= target:
        return dim
    nblocks = -(-dim // target)
    return _round_up(-(-dim // nblocks), granule)


def _rpl_kernel(*refs, has_bias: bool, acc_in_out: bool):
    # grid = (M//tm, N//tn, K//tk); K (reduction) is the innermost axis and
    # the output block index is K-independent, so the output/accumulator tile
    # stays resident in VMEM across the whole K loop.
    x_ref, w_ref = refs[0], refs[1]
    idx = 2
    b_ref = None
    if has_bias:
        b_ref = refs[idx]
        idx += 1
    o_ref = refs[idx]
    idx += 1
    acc_ref = o_ref if acc_in_out else refs[idx]

    k = pl.program_id(2)

    @pl.when(k == 0)
    def _():
        acc_ref[...] = jnp.zeros_like(acc_ref)

    # x tile (tm, tk) contracted with the weight tile in its *native* (N, K)
    # layout (tn, tk) on their last dims -> (tm, tn).  No extra HBM pass to
    # transpose the weight on the host.
    # TODO(synk): verify via pl.lower_as_mlir that this ((1,),(1,)) contraction
    # does not emit a per-tile transpose; if it does, re-layout the weight to
    # (K, N) once at parameter-load time instead.
    acc_ref[...] += jax.lax.dot_general(
        x_ref[...],
        w_ref[...],
        dimension_numbers=(((1,), (1,)), ((), ())),
        preferred_element_type=jnp.float32,
    )

    if has_bias or not acc_in_out:
        @pl.when(k == pl.num_programs(2) - 1)
        def _():
            if acc_in_out:
                # f32 output: accumulation happened directly in o_ref.
                o_ref[...] += b_ref[...].astype(jnp.float32)
            else:
                acc = acc_ref[...]
                if has_bias:
                    acc = acc + b_ref[...].astype(jnp.float32)
                o_ref[...] = acc.astype(o_ref.dtype)


def row_parallel_linear(x, weight, bias=None, *, tm=None, tn=None, tk=None):
    """y = x @ weight.T (+ bias).  weight: (out_features, in_features)."""
    orig_shape = x.shape
    N, K = weight.shape
    assert orig_shape[-1] == K, "last dim of x must equal in_features"

    x2d = x.reshape(-1, K)
    M = x2d.shape[0]
    out_dtype = jnp.result_type(x.dtype, weight.dtype)
    acc_in_out = out_dtype == jnp.float32

    dx = jnp.dtype(x2d.dtype).itemsize
    dw = jnp.dtype(weight.dtype).itemsize
    do = jnp.dtype(out_dtype).itemsize

    # Sublane granule for the second-to-last block dim (dtype packing).
    sub = {4: 8, 2: 16, 1: 32}.get(dx, 8)

    # Balanced tile selection.  Small-M (decode-like) problems are
    # weight-bandwidth bound: grow the weight tile (tk, tn) to ~1024 to
    # quarter the grid-step count and amortize per-step overhead.
    small_m = M <= 256
    if tm is None:
        tm = _fit_tile(M, 512, sub)
    if tk is None:
        tk = _fit_tile(K, 1024 if small_m else 512, 128)
    if tn is None:
        tn = _fit_tile(N, 1024 if small_m else 512, 128)

    Mp = _round_up(M, tm)
    Kp = _round_up(K, tk)
    Np = _round_up(N, tn)

    # Host-side padding only triggers for large ragged dims; zeros contribute
    # nothing to the contraction.
    if (Mp, Kp) != (M, K):
        x2d = jnp.pad(x2d, ((0, Mp - M), (0, Kp - K)))
    w = weight
    if (Np, Kp) != (N, K):
        w = jnp.pad(w, ((0, Np - N), (0, Kp - K)))

    has_bias = bias is not None
    inputs = [x2d, w]
    in_specs = [
        pl.BlockSpec((tm, tk), lambda i, j, k: (i, k)),   # x
        pl.BlockSpec((tn, tk), lambda i, j, k: (j, k)),   # weight, native (N, K)
    ]
    b_itemsize = 0
    if has_bias:
        # Keep bias in its native dtype; cast to f32 inside the kernel and add
        # to the f32 accumulator *before* the output cast.
        b2d = bias.reshape(1, N)
        if Np != N:
            b2d = jnp.pad(b2d, ((0, 0), (0, Np - N)))
        b_itemsize = jnp.dtype(b2d.dtype).itemsize
        inputs.append(b2d)
        in_specs.append(pl.BlockSpec((1, tn), lambda i, j, k: (0, j)))

    grid = (Mp // tm, Np // tn, Kp // tk)

    # f32 outputs accumulate directly in the resident output block.
    scratch_shapes = [] if acc_in_out else [pltpu.VMEM((tm, tn), jnp.float32)]

    # Double-buffered VMEM footprint estimate; raise the scoped limit only
    # when needed and cap at 48 MiB (inside v7x's 64 MiB physical VMEM).
    # NOTE: pipeline_mode=pl.Buffered(3) on x/weight is a further option when
    # headroom allows; left at the default depth here for portability.
    vmem_est = 2 * (tm * tk * dx + tn * tk * dw + tm * tn * do)
    if not acc_in_out:
        vmem_est += tm * tn * 4
    if has_bias:
        vmem_est += 2 * tn * b_itemsize
    compiler_kwargs = dict(
        dimension_semantics=("parallel", "parallel", "arbitrary"))
    if vmem_est > 14 * 1024 * 1024:
        compiler_kwargs["vmem_limit_bytes"] = min(
            _round_up(int(vmem_est * 1.4), 1024 * 1024), 48 * 1024 * 1024)

    # Cost estimate including cross-tile re-read factors (weight is re-read
    # once per M block, x once per N block).
    n_i, n_j = grid[0], grid[1]
    bytes_accessed = (
        Mp * Kp * dx * n_j
        + Np * Kp * dw * n_i
        + Mp * Np * do
        + (Np * b_itemsize * n_i if has_bias else 0)
    )
    cost = pl.CostEstimate(
        flops=2 * Mp * Np * Kp,
        transcendentals=0,
        bytes_accessed=int(bytes_accessed),
    )

    kernel = functools.partial(
        _rpl_kernel, has_bias=has_bias, acc_in_out=acc_in_out)

    y2d = pl.pallas_call(
        kernel,
        out_shape=jax.ShapeDtypeStruct((Mp, Np), out_dtype),
        grid_spec=pltpu.PrefetchScalarGridSpec(
            num_scalar_prefetch=0,
            grid=grid,
            in_specs=in_specs,
            out_specs=pl.BlockSpec((tm, tn), lambda i, j, k: (i, j)),
            scratch_shapes=scratch_shapes,
        ),
        compiler_params=pltpu.CompilerParams(**compiler_kwargs),
        cost_estimate=cost,
    )(*inputs)

    if (Mp, Np) != (M, N):
        y2d = y2d[:M, :N]
    return y2d.reshape(*orig_shape[:-1], N)


if __name__ == "__main__":
    key = jax.random.PRNGKey(0)
    k1, k2, k3, k4, k5, k6, k7, k8 = jax.random.split(key, 8)

    # --- Case 1: aligned shapes, with bias (single full-extent block) ---
    batch, seq, in_f, out_f = 2, 8, 128, 256
    x = jax.random.normal(k1, (batch, seq, in_f), dtype=jnp.float32)
    w = jax.random.normal(k2, (out_f, in_f), dtype=jnp.float32) * 0.02
    b = jax.random.normal(k3, (out_f,), dtype=jnp.float32) * 0.1
    y = jax.block_until_ready(row_parallel_linear(x, w, b))
    y_ref = x @ w.T + b
    assert y.shape == (batch, seq, out_f)
    assert jnp.allclose(y, y_ref, atol=2e-2, rtol=2e-2), "case 1 mismatch"

    # --- Case 2: ragged (non-128-aligned) shapes, no bias; full-extent blocks,
    # so no host-side padding pass is needed at all ---
    b2, s2, in2, out2 = 2, 5, 96, 200
    x2 = jax.random.normal(k4, (b2, s2, in2), dtype=jnp.float32)
    w2 = jax.random.normal(k5, (out2, in2), dtype=jnp.float32) * 0.02
    y2 = jax.block_until_ready(row_parallel_linear(x2, w2))
    assert y2.shape == (b2, s2, out2)
    assert jnp.allclose(y2, x2 @ w2.T, atol=2e-2, rtol=2e-2), "case 2 mismatch"

    # --- Case 3: forced multi-block grid (K-resident accumulation directly in
    # the output block + bias finalize on the last K step) ---
    m3, in3, out3 = 16, 384, 256
    x3 = jax.random.normal(k6, (m3, in3), dtype=jnp.float32)
    w3 = jax.random.normal(k7, (out3, in3), dtype=jnp.float32) * 0.02
    b3 = jax.random.normal(k8, (out3,), dtype=jnp.float32) * 0.1
    y3 = jax.block_until_ready(
        row_parallel_linear(x3, w3, b3, tm=8, tn=128, tk=128))
    assert jnp.allclose(y3, x3 @ w3.T + b3, atol=2e-2, rtol=2e-2), "case 3 mismatch"

    # --- Case 4: bf16 inputs/outputs (exercises the f32 scratch path) ---
    x4 = x3.astype(jnp.bfloat16)
    w4 = w3.astype(jnp.bfloat16)
    y4 = jax.block_until_ready(row_parallel_linear(x4, w4, tn=128, tk=128))
    y4_ref = (x3 @ w3.T).astype(jnp.bfloat16)
    assert y4.dtype == jnp.bfloat16
    assert jnp.allclose(y4.astype(jnp.float32), y4_ref.astype(jnp.float32),
                        atol=5e-2, rtol=5e-2), "case 4 mismatch"

    print("KERNEL_OK")
</pallas_src>

<mosaic_0001>
module attributes {stable_mosaic.version = 11 : i64} {
  func.func @_rpl_kernel(%arg0: i32, %arg1: i32, %arg2: i32, %arg3: memref<16x128xf32, #tpu.memory_space<vmem>>, %arg4: memref<256x128xf32, #tpu.memory_space<vmem>>, %arg5: memref<1x256xf32, #tpu.memory_space<vmem>>, %arg6: memref<16x256xf32, #tpu.memory_space<vmem>>) attributes {dimension_semantics = [#tpu.dimension_semantics<parallel>, #tpu.dimension_semantics<parallel>, #tpu.dimension_semantics<arbitrary>], iteration_bounds = array<i64: 1, 1, 1>, scalar_prefetch = 0 : i64, scratch_operands = 0 : i64, tpu.core_type = #tpu.core_type<tc>, window_params = [{transform_indices = @transform_0, window_bounds = array<i64: 16, 128>}, {transform_indices = @transform_1, window_bounds = array<i64: 256, 128>}, {transform_indices = @transform_2, window_bounds = array<i64: 1, 256>}, {transform_indices = @transform_3, window_bounds = array<i64: 16, 256>}]} {
    %c0_i32 = arith.constant 0 : i32
    %0 = arith.cmpi eq, %arg2, %c0_i32 : i32
    %1 = arith.extui %0 : i1 to i32
    %c0_i32_0 = arith.constant 0 : i32
    %2 = arith.cmpi ne, %1, %c0_i32_0 : i32
    scf.if %2 {
      %cst_10 = arith.constant 0.000000e+00 : f32
      %12 = vector.broadcast %cst_10 : f32 to vector<16x256xf32>
      %c0_11 = arith.constant 0 : index
      %c0_12 = arith.constant 0 : index
      %13 = vector.load %arg6[%c0_11, %c0_12] : memref<16x256xf32, #tpu.memory_space<vmem>>, vector<16x256xf32>
      tpu.vector_store %arg6[%c0_11, %c0_12], %12 {strides = array<i32>} : memref<16x256xf32, #tpu.memory_space<vmem>>, vector<16x256xf32>,
    } else {
    }
    %c0 = arith.constant 0 : index
    %c0_1 = arith.constant 0 : index
    %3 = vector.load %arg6[%c0, %c0_1] : memref<16x256xf32, #tpu.memory_space<vmem>>, vector<16x256xf32>
    %c0_2 = arith.constant 0 : index
    %c0_3 = arith.constant 0 : index
    %4 = vector.load %arg3[%c0_2, %c0_3] : memref<16x128xf32, #tpu.memory_space<vmem>>, vector<16x128xf32>
    %c0_4 = arith.constant 0 : index
    %c0_5 = arith.constant 0 : index
    %5 = vector.load %arg4[%c0_4, %c0_5] : memref<256x128xf32, #tpu.memory_space<vmem>>, vector<256x128xf32>
    %cst = arith.constant dense<0.000000e+00> : vector<16x256xf32>
    %6 = tpu.matmul %4, %5, %cst {dimension_numbers = #tpu.dot_dimension_numbers<[1], [1], [0], [0], [0, 0, 1, 0], [], []>} : vector<16x128xf32>, vector<256x128xf32>, vector<16x256xf32> -> vector<16x256xf32>
    %7 = arith.addf %3, %6 : vector<16x256xf32>
    %c0_6 = arith.constant 0 : index
    %c0_7 = arith.constant 0 : index
    %8 = vector.load %arg6[%c0_6, %c0_7] : memref<16x256xf32, #tpu.memory_space<vmem>>, vector<16x256xf32>
    tpu.vector_store %arg6[%c0_6, %c0_7], %7 {strides = array<i32>} : memref<16x256xf32, #tpu.memory_space<vmem>>, vector<16x256xf32>,
    %c0_i32_8 = arith.constant 0 : i32
    %9 = arith.cmpi eq, %arg2, %c0_i32_8 : i32
    %10 = arith.extui %9 : i1 to i32
    %c0_i32_9 = arith.constant 0 : i32
    %11 = arith.cmpi ne, %10, %c0_i32_9 : i32
    scf.if %11 {
      %c0_10 = arith.constant 0 : index
      %c0_11 = arith.constant 0 : index
      %12 = vector.load %arg6[%c0_10, %c0_11] : memref<16x256xf32, #tpu.memory_space<vmem>>, vector<16x256xf32>
      %c0_12 = arith.constant 0 : index
      %c0_13 = arith.constant 0 : index
      %13 = vector.load %arg5[%c0_12, %c0_13] : memref<1x256xf32, #tpu.memory_space<vmem>>, vector<1x256xf32>
      %14 = vector.broadcast %13 : vector<1x256xf32> to vector<16x256xf32>
      %15 = arith.addf %12, %14 : vector<16x256xf32>
      %c0_14 = arith.constant 0 : index
      %c0_15 = arith.constant 0 : index
      %16 = vector.load %arg6[%c0_14, %c0_15] : memref<16x256xf32, #tpu.memory_space<vmem>>, vector<16x256xf32>
      tpu.vector_store %arg6[%c0_14, %c0_15], %15 {strides = array<i32>} : memref<16x256xf32, #tpu.memory_space<vmem>>, vector<16x256xf32>,
    } else {
    }
    return
  }
  func.func @transform_0(%arg0: i32, %arg1: i32, %arg2: i32) -> (i32, i32) {
    %c0_i32 = arith.constant 0 : i32
    return %arg0, %arg2 : i32, i32
  }
  func.func @transform_1(%arg0: i32, %arg1: i32, %arg2: i32) -> (i32, i32) {
    %c0_i32 = arith.constant 0 : i32
    return %arg1, %arg2 : i32, i32
  }
  func.func @transform_2(%arg0: i32, %arg1: i32, %arg2: i32) -> (i32, i32) {
    %c0_i32 = arith.constant 0 : i32
    %c0_i32_0 = arith.constant 0 : i32
    return %c0_i32, %arg1 : i32, i32
  }
  func.func @transform_3(%arg0: i32, %arg1: i32, %arg2: i32) -> (i32, i32) {
    %c0_i32 = arith.constant 0 : i32
    return %arg0, %arg1 : i32, i32
  }
}

</mosaic_0001>

<llo_original>
// kernel: tpu_custom_call.1
$region0: #{tpu_custom_call.1}
  #allocation0 [shape = 'u32[]', space=smem, size = 0x4, offset = 0x4, fixed_abs, tag = 'smem constant byte address 0x4 - core index']
  #allocation1 [shape = 'u32[144,128]{1,0:T(1,128)}', space=vmem, size = 0x12000, scoped, tag = 'internal scratch']
  %s0 = inlined_call_operand.hbm [shape: f32[16,128], index: 0, kind: input, shape index: {}]
  %s1 = inlined_call_operand.hbm [shape: f32[256,128], index: 1, kind: input, shape index: {}]
  %s2 = inlined_call_operand.vmem [shape: f32[1,256], index: 2, kind: input, shape index: {}]
  %s3 = inlined_call_operand.hbm [shape: f32[16,256], index: 3, kind: output, shape index: {}]
  %s4 = sld [smem:[#allocation0]]
  $region38: #{tpu_custom_call.1} parent=0
    _
  %s6 = ssub.s32 1, %s4
  %s7 = scalar_select 0, %s6, %s4
  $region1: #{tpu_custom_call.1} parent=0
    #allocation2 [shape = 'u8[8192]{0}', space=vmem, size = 0x2000, scoped, tag = 'input window, operand 0, single buffered']
    #allocation3 [shape = 's32[1]{0}', space=sflag, size = 0x4, scoped, tag = 'scoped memory for tpu_custom_call.1']
    #allocation4 [shape = 's32[1]{0}', space=sflag, size = 0x4, scoped, tag = 'scoped memory for tpu_custom_call.1']
    #allocation5 [shape = 'u8[131072]{0}', space=vmem, size = 0x20000, scoped, tag = 'input window, operand 1, single buffered']
    #allocation6 [shape = 's32[1]{0}', space=sflag, size = 0x4, scoped, tag = 'scoped memory for tpu_custom_call.1']
    #allocation7 [shape = 'u8[16384]{0}', space=vmem, size = 0x4000, scoped, tag = 'output window, operand 0, single buffered']
    %8 = vsyncpa [#allocation3], 0
    %9 = vsyncpa [#allocation6], 0
    %10 = vsyncpa [#allocation4], 0
    // Predicated region
    $region2: #{tpu_custom_call.1} parent=1 // pred_check
      _
    $region3: #{tpu_custom_call.1} parent=1 // pred_check_branch
      %12 = sbr.rel (0) target = $region5
    $region4: #{tpu_custom_call.1} parent=1 // pred_region
      %s14 = ssub.s32 256, 256
      %15 = vsyncadd [#allocation3], %s14
      %s16 = sshll.u32 [#allocation2], 4
      %s17 = int_to_ptr.vmem [resolvable:$true] %s16
      %22 = dma.hbm_to_vmem [thread:$0]  %s0, 256, %s17, [#allocation3], 128, 128, 8
    $region5: #{tpu_custom_call.1} parent=1 // pred_fallthru
      _
    // Predicated region
    $region6: #{tpu_custom_call.1} parent=1 // pred_check
      _
    $region7: #{tpu_custom_call.1} parent=1 // pred_check_branch
      %24 = sbr.rel (0) target = $region9
    $region8: #{tpu_custom_call.1} parent=1 // pred_region
      %s26 = ssub.s32 4096, 4096
      %27 = vsyncadd [#allocation6], %s26
      %s28 = sshll.u32 [#allocation5], 4
      %s29 = int_to_ptr.vmem [resolvable:$true] %s28
      %34 = dma.hbm_to_vmem [thread:$0]  %s1, 4096, %s29, [#allocation6], 128, 128, 8
    $region9: #{tpu_custom_call.1} parent=1 // pred_fallthru
      _
    // Predicated region
    $region10: #{tpu_custom_call.1} parent=1 // pred_check
      _
    $region11: #{tpu_custom_call.1} parent=1 // pred_check_branch
      %36 = sbr.rel (0) target = $region13
    $region12: #{tpu_custom_call.1} parent=1 // pred_region
      _
    $region13: #{tpu_custom_call.1} parent=1 // pred_fallthru
      _
    // Predicated region
    $region14: #{tpu_custom_call.1} parent=1 // pred_check
      _
    $region15: #{tpu_custom_call.1} parent=1 // pred_check_branch
      %38 = sbr.rel (0) target = $region17
    $region16: #{tpu_custom_call.1} parent=1 // pred_region
      %39 = dma.done [#allocation3], 256
    $region17: #{tpu_custom_call.1} parent=1 // pred_fallthru
      _
    // Predicated region
    $region18: #{tpu_custom_call.1} parent=1 // pred_check
      _
    $region19: #{tpu_custom_call.1} parent=1 // pred_check_branch
      %41 = sbr.rel (0) target = $region21
    $region20: #{tpu_custom_call.1} parent=1 // pred_region
      %42 = dma.done [#allocation6], 4096
    $region21: #{tpu_custom_call.1} parent=1 // pred_fallthru
      _
    %p43 = scmp.eq.s32.totalorder 0, 0
    // Predicated region
    $region22: #{tpu_custom_call.1} parent=1 // pred_check
      %p44 = pneg %p43
    $region23: #{tpu_custom_call.1} parent=1 // pred_check_branch
      %46 = sbr.rel (%p44) target = $region25
    $region24: #{tpu_custom_call.1} parent=1 // pred_region
      %47 = vst [vmem:[#allocation7] sm:$0xff] 0.0
      %48 = vst [vmem:[#allocation7 + $0x8] sm:$0xff] 0.0
      %49 = vst [vmem:[#allocation7 + $0x10] sm:$0xff] 0.0
      %50 = vst [vmem:[#allocation7 + $0x18] sm:$0xff] 0.0
    $region25: #{tpu_custom_call.1} parent=1 // pred_fallthru
      _
    %v51 = vld [vmem:[#allocation7] sm:$0xff]
    %v52 = vld [vmem:[#allocation7 + $0x8] sm:$0xff]
    %v53 = vld [vmem:[#allocation7 + $0x10] sm:$0xff]
    %v54 = vld [vmem:[#allocation7 + $0x18] sm:$0xff]
    %v55 = vld [vmem:[#allocation2] sm:$0xff]
    %v56 = vld [vmem:[#allocation2 + $0x8] sm:$0xff]
    %v57 = vld [vmem:[#allocation5] sm:$0xff]
    %v58 = vld [vmem:[#allocation5 + $0x8] sm:$0xff]
    %v59 = vld [vmem:[#allocation5 + $0x10] sm:$0xff]
    %v60 = vld [vmem:[#allocation5 + $0x18] sm:$0xff]
    %v61 = vld [vmem:[#allocation5 + $0x20] sm:$0xff]
    %v62 = vld [vmem:[#allocation5 + $0x28] sm:$0xff]
    %v63 = vld [vmem:[#allocation5 + $0x30] sm:$0xff]
    %v64 = vld [vmem:[#allocation5 + $0x38] sm:$0xff]
    %v65 = vld [vmem:[#allocation5 + $0x40] sm:$0xff]
    %v66 = vld [vmem:[#allocation5 + $0x48] sm:$0xff]
    %v67 = vld [vmem:[#allocation5 + $0x50] sm:$0xff]
    %v68 = vld [vmem:[#allocation5 + $0x58] sm:$0xff]
    %v69 = vld [vmem:[#allocation5 + $0x60] sm:$0xff]
    %v70 = vld [vmem:[#allocation5 + $0x68] sm:$0xff]
    %v71 = vld [vmem:[#allocation5 + $0x70] sm:$0xff]
    %v72 = vld [vmem:[#allocation5 + $0x78] sm:$0xff]
    %v73 = vld [vmem:[#allocation5 + $0x80] sm:$0xff]
    %v74 = vld [vmem:[#allocation5 + $0x88] sm:$0xff]
    %v75 = vld [vmem:[#allocation5 + $0x90] sm:$0xff]
    %v76 = vld [vmem:[#allocation5 + $0x98] sm:$0xff]
    %v77 = vld [vmem:[#allocation5 + $0xa0] sm:$0xff]
    %v78 = vld [vmem:[#allocation5 + $0xa8] sm:$0xff]
    %v79 = vld [vmem:[#allocation5 + $0xb0] sm:$0xff]
    %v80 = vld [vmem:[#allocation5 + $0xb8] sm:$0xff]
    %v81 = vld [vmem:[#allocation5 + $0xc0] sm:$0xff]
    %v82 = vld [vmem:[#allocation5 + $0xc8] sm:$0xff]
    %v83 = vld [vmem:[#allocation5 + $0xd0] sm:$0xff]
    %v84 = vld [vmem:[#allocation5 + $0xd8] sm:$0xff]
    %v85 = vld [vmem:[#allocation5 + $0xe0] sm:$0xff]
    %v86 = vld [vmem:[#allocation5 + $0xe8] sm:$0xff]
    %v87 = vld [vmem:[#allocation5 + $0xf0] sm:$0xff]
    %v88 = vld [vmem:[#allocation5 + $0xf8] sm:$0xff]
    %89 = vmatprep.subr.mxu0 0.0
    %90 = vmatpush1.xpose.msra.mxu0 %v57
    %91 = vmatprep.subr.mxu0 0.0
    %92 = vmatpush1.xpose.msra.mxu0 %v58
    %93 = vmatprep.subr.mxu0 0.0
    %94 = vmatpush1.xpose.msra.mxu0 %v59
    %95 = vmatprep.subr.mxu0 0.0
    %96 = vmatpush1.xpose.msra.mxu0 %v60
    %97 = vmatprep.subr.mxu0 0.0
    %98 = vmatpush1.xpose.msra.mxu0 %v61
    %99 = vmatprep.subr.mxu0 0.0
    %100 = vmatpush1.xpose.msra.mxu0 %v62
    %101 = vmatprep.subr.mxu0 0.0
    %102 = vmatpush1.xpose.msra.mxu0 %v63
    %103 = vmatprep.subr.mxu0 0.0
    %104 = vmatpush1.xpose.msra.mxu0 %v64
    %105 = vmatprep.subr.mxu0 0.0
    %106 = vmatpush1.xpose.msra.mxu0 %v65
    %107 = vmatprep.subr.mxu0 0.0
    %108 = vmatpush1.xpose.msra.mxu0 %v66
    %109 = vmatprep.subr.mxu0 0.0
    %110 = vmatpush1.xpose.msra.mxu0 %v67
    %111 = vmatprep.subr.mxu0 0.0
    %112 = vmatpush1.xpose.msra.mxu0 %v68
    %113 = vmatprep.subr.mxu0 0.0
    %114 = vmatpush1.xpose.msra.mxu0 %v69
    %115 = vmatprep.subr.mxu0 0.0
    %116 = vmatpush1.xpose.msra.mxu0 %v70
    %117 = vmatprep.subr.mxu0 0.0
    %118 = vmatpush1.xpose.msra.mxu0 %v71
    %119 = vmatprep.subr.mxu0 0.0
    %120 = vmatpush1.xpose.msra.mxu0 %v72
    %121 = vmatprep.subr.mxu0 0.0
    %122 = vmatpush1.xpose.msra.mxu0 %v73
    %123 = vmatprep.subr.mxu0 0.0
    %124 = vmatpush1.xpose.msra.mxu0 %v74
    %125 = vmatprep.subr.mxu0 0.0
    %126 = vmatpush1.xpose.msra.mxu0 %v75
    %127 = vmatprep.subr.mxu0 0.0
    %128 = vmatpush1.xpose.msra.mxu0 %v76
    %129 = vmatprep.subr.mxu0 0.0
    %130 = vmatpush1.xpose.msra.mxu0 %v77
    %131 = vmatprep.subr.mxu0 0.0
    %132 = vmatpush1.xpose.msra.mxu0 %v78
    %133 = vmatprep.subr.mxu0 0.0
    %134 = vmatpush1.xpose.msra.mxu0 %v79
    %135 = vmatprep.subr.mxu0 0.0
    %136 = vmatpush1.xpose.msra.mxu0 %v80
    %137 = vmatprep.subr.mxu0 0.0
    %138 = vmatpush1.xpose.msra.mxu0 %v81
    %139 = vmatprep.subr.mxu0 0.0
    %140 = vmatpush1.xpose.msra.mxu0 %v82
    %141 = vmatprep.subr.mxu0 0.0
    %142 = vmatpush1.xpose.msra.mxu0 %v83
    %143 = vmatprep.subr.mxu0 0.0
    %144 = vmatpush1.xpose.msra.mxu0 %v84
    %145 = vmatprep.subr.mxu0 0.0
    %146 = vmatpush1.xpose.msra.mxu0 %v85
    %147 = vmatprep.subr.mxu0 0.0
    %148 = vmatpush1.xpose.msra.mxu0 %v86
    %149 = vmatprep.subr.mxu0 0.0
    %150 = vmatpush1.xpose.msra.mxu0 %v87
    %151 = vmatprep.subr.mxu0 0.0
    %152 = vmatpush1.xpose.msra.mxu0 %v88
    %153 = vmatprep.mubr.f32.mxu0 0.0
    %154 = vmatmul.mubr.f32.gmra.mrb[0].mxu0 %v55
    %v155 = vpop.f32.mrb[0].mxu0
    %v156 = vadd.f32 0.0, %v155
    %v157 = vpop.f32.mrb[0].mxu0
    %v158 = vadd.f32 0.0, %v157
    %159 = vmatprep.mubr.f32.mxu0 0.0
    %160 = vmatmul.mubr.f32.gmra.mrb[0].mxu0 %v56
    %v161 = vpop.f32.mrb[0].mxu0
    %v162 = vadd.f32 0.0, %v161
    %v163 = vpop.f32.mrb[0].mxu0
    %v164 = vadd.f32 0.0, %v163
    %165 = vdwg.mxu0
    %v166 = vadd.f32 %v51, %v156
    %v167 = vadd.f32 %v52, %v158
    %v168 = vadd.f32 %v53, %v162
    %v169 = vadd.f32 %v54, %v164
    %170 = vst [vmem:[#allocation7] sm:$0xff] %v166
    %171 = vst [vmem:[#allocation7 + $0x8] sm:$0xff] %v167
    %172 = vst [vmem:[#allocation7 + $0x10] sm:$0xff] %v168
    %173 = vst [vmem:[#allocation7 + $0x18] sm:$0xff] %v169
    // Predicated region
    $region26: #{tpu_custom_call.1} parent=1 // pred_check
      %p174 = pneg %p43
    $region27: #{tpu_custom_call.1} parent=1 // pred_check_branch
      %176 = sbr.rel (%p174) target = $region29
    $region28: #{tpu_custom_call.1} parent=1 // pred_region
      %v177 = vld [vmem:[#allocation7] sm:$0xff]
      %v178 = vld [vmem:[#allocation7 + $0x8] sm:$0xff]
      %v179 = vld [vmem:[#allocation7 + $0x10] sm:$0xff]
      %v180 = vld [vmem:[#allocation7 + $0x18] sm:$0xff]
      %v181 = vld [vmem:[%s2] sm:$0x3]
      %v183 = vlaneseq
      %v184 = vshrl.u32 %v183, 7
      %v185 = vsub.s32 0, %v184
      %v186 = vrot.slane %v181, %v185
      %v187 = vlaneseq
      %v188 = vshrl.u32 %v187, 7
      %v189 = vsub.s32 1, %v188
      %v190 = vrot.slane %v181, %v189
      %v193 = vadd.f32 %v177, %v186
      %v194 = vadd.f32 %v178, %v190
      %v195 = vadd.f32 %v179, %v186
      %v196 = vadd.f32 %v180, %v190
      %197 = vst [vmem:[#allocation7] sm:$0xff] %v193
      %198 = vst [vmem:[#allocation7 + $0x8] sm:$0xff] %v194
      %199 = vst [vmem:[#allocation7 + $0x10] sm:$0xff] %v195
      %200 = vst [vmem:[#allocation7 + $0x18] sm:$0xff] %v196
    $region29: #{tpu_custom_call.1} parent=1 // pred_fallthru
      _
    // Predicated region
    $region30: #{tpu_custom_call.1} parent=1 // pred_check
      _
    $region31: #{tpu_custom_call.1} parent=1 // pred_check_branch
      %202 = sbr.rel (0) target = $region33
    $region32: #{tpu_custom_call.1} parent=1 // pred_region
      %s204 = ssub.s32 512, 512
      %205 = vsyncadd [#allocation4], %s204
      %s206 = sshll.u32 [#allocation7], 4
      %s207 = int_to_ptr.vmem [resolvable:$true] %s206
      %212 = dma.vmem_to_hbm [thread:$0]  %s207, 512, %s3, [#allocation4], 256, 256, 16
    $region33: #{tpu_custom_call.1} parent=1 // pred_fallthru
      _
    // Predicated region
    $region34: #{tpu_custom_call.1} parent=1 // pred_check
      _
    $region35: #{tpu_custom_call.1} parent=1 // pred_check_branch
      %214 = sbr.rel (0) target = $region37
    $region36: #{tpu_custom_call.1} parent=1 // pred_region
      %215 = dma.done [#allocation4], 512
    $region37: #{tpu_custom_call.1} parent=1 // pred_fallthru
      _
    %216 = vsyncpa [#allocation3], 1
    %217 = vsyncpa [#allocation6], 1
    %218 = vsyncpa [#allocation4], 1

</llo_original>
